<compile_context>
chip_gen: v5e
topology: v5e:2x2
jax: 0.10.0
libtpu: 0.0.40
codegen_flags: <defaults>
</compile_context>

<pallas_src>
import jax
import jax.numpy as jnp
from jax.experimental import pallas as pl
from jax.experimental.pallas import tpu as pltpu

_LANES = 128
_SUBLANES = 8
_NARROW_MAX = 8  # feature parts at/below this width use the VPU rank-k path


def _round_up(x, m):
    return ((x + m - 1) // m) * m


# ----------------------------------------------------------------------------
# Init-time parameter preparation (hoisted out of the forward path).
# ----------------------------------------------------------------------------
def init_decoder_params(key, decoder_input_dim, latent_dim, dtype=jnp.float32):
    """Deterministic init matching nn.Linear default (uniform +/- 1/sqrt(fan_in))."""
    k1, k2, k3, k4 = jax.random.split(key, 4)
    lim1 = 1.0 / jnp.sqrt(decoder_input_dim)
    lim2 = 1.0 / jnp.sqrt(latent_dim)
    return {
        "w1": jax.random.uniform(k1, (decoder_input_dim, latent_dim), dtype, -lim1, lim1),
        "b1": jax.random.uniform(k2, (1, latent_dim), dtype, -lim1, lim1),
        "w2": jax.random.uniform(k3, (latent_dim, latent_dim), dtype, -lim2, lim2),
        "b2": jax.random.uniform(k4, (1, latent_dim), dtype, -lim2, lim2),
    }


def prepare_decoder_params(params, part_dims, compute_dtype=jnp.bfloat16):
    """Split W1 at the torch.cat boundaries, merge the wide slices into a single
    MXU operand, lane-pad the hidden width, and cast matmul operands to the
    MXU-native compute dtype.  Biases stay f32 (f32 epilogue on all chips).
    Done once at init time; the per-call wrapper does no weight work."""
    w1, b1, w2, b2 = params["w1"], params["b1"], params["w2"], params["b2"]
    part_dims = tuple(int(d) for d in part_dims)
    K, H = int(w1.shape[0]), int(w1.shape[1])
    O = int(w2.shape[1])
    assert sum(part_dims) == K, "W1 rows must match concatenated feature width"

    Hp = _round_up(H, _LANES)

    slices, off = [], 0
    for d in part_dims:
        slices.append(w1[off:off + d, :])
        off += d
    narrow_idx = tuple(i for i, d in enumerate(part_dims) if d <= _NARROW_MAX)
    wide_idx = tuple(i for i, d in enumerate(part_dims) if d > _NARROW_MAX)

    def _pad_h(w):
        return jnp.pad(w, ((0, 0), (0, Hp - H))) if Hp != H else w

    w1_wide = None
    if wide_idx:
        w1_wide = jnp.concatenate([slices[i] for i in wide_idx], axis=0)
        w1_wide = _pad_h(w1_wide).astype(compute_dtype)
    # Narrow slices stay f32: they feed VPU FMAs on the f32 accumulator.
    w1_narrow = tuple(_pad_h(slices[i]).astype(jnp.float32) for i in narrow_idx)

    b1_p = _pad_h(b1.reshape(1, H)).astype(jnp.float32)
    w2_p = (jnp.pad(w2, ((0, Hp - H), (0, 0))) if Hp != H else w2).astype(compute_dtype)
    b2_p = b2.reshape(1, O).astype(jnp.float32)

    return {
        "part_dims": part_dims,
        "narrow_idx": narrow_idx,
        "wide_idx": wide_idx,
        "w1_wide": w1_wide,
        "w1_narrow": w1_narrow,
        "b1": b1_p,
        "w2": w2_p,
        "b2": b2_p,
        "hidden_pad": Hp,
        "out_dim": O,
        "compute_dtype": compute_dtype,
    }


# ----------------------------------------------------------------------------
# Kernel.
# ----------------------------------------------------------------------------
def _make_decoder_kernel(n_wide, narrow_dims):
    """Fused concat + 2-layer MLP on one [TM, :] row tile.

    Ref order: wide_x?, narrow_x..., wide_w1?, narrow_w1..., b1, w2, b2, out.
    """
    n_narrow = len(narrow_dims)
    n_act = n_wide + n_narrow

    def kernel(*refs):
        acts = refs[:n_act]
        wide_x = acts[0] if n_wide else None
        narrow_x = acts[n_wide:]
        w = refs[n_act:2 * n_act]
        wide_w1 = w[0] if n_wide else None
        narrow_w1 = w[n_wide:]
        b1_ref, w2_ref, b2_ref = refs[2 * n_act:2 * n_act + 3]
        o_ref = refs[-1]

        # ---- Layer 1: single MXU matmul for the merged wide parts (bf16 in,
        # f32 accumulate) ... ----
        if n_wide:
            h = jnp.dot(wide_x[...], wide_w1[...],
                        preferred_element_type=jnp.float32)
        else:
            h = jnp.zeros((o_ref.shape[0], b1_ref.shape[1]), jnp.float32)
        h = h + b1_ref[...]  # f32 bias broadcast

        # ... plus VPU rank-d updates for the tiny parts (avoids tiny-K MXU
        # pushes; pure f32 VPU, safe on v5e).
        for x_ref, w_ref, d in zip(narrow_x, narrow_w1, narrow_dims):
            xv = x_ref[...]  # [TM, d] f32
            wv = w_ref[...]  # [d, Hp] f32
            for k in range(d):
                h = h + xv[:, k:k + 1] * wv[k:k + 1, :]

        h = jnp.maximum(h, 0.0)  # ReLU, f32 epilogue

        # ---- Layer 2: MXU matmul, f32 accumulation, unpadded (lane-masked)
        # output store. ----
        out = jnp.dot(h.astype(w2_ref.dtype), w2_ref[...],
                      preferred_element_type=jnp.float32) + b2_ref[...]
        o_ref[...] = out.astype(o_ref.dtype)

    return kernel


# ----------------------------------------------------------------------------
# Forward wrapper.
# ----------------------------------------------------------------------------
def decoder_forward(x_in, r_det, prepared, z_lat=None, block_m=1024):
    """Pallas implementation of Decoder.forward.

    x_in: [B, N, Dx]   r_det: [B, N, Dr]   z_lat (optional): [B, N, Dz]
    prepared: output of prepare_decoder_params.
    returns: [B, N, latent_dim]
    """
    parts = [x_in, r_det] + ([z_lat] if z_lat is not None else [])
    part_dims = tuple(int(p.shape[-1]) for p in parts)
    assert part_dims == prepared["part_dims"], "inputs do not match prepared params"

    B, N = x_in.shape[0], x_in.shape[1]
    M = B * N
    O = prepared["out_dim"]
    Hp = prepared["hidden_pad"]
    cdt = prepared["compute_dtype"]
    out_dtype = x_in.dtype

    parts2d = [p.reshape(M, d) for p, d in zip(parts, part_dims)]
    wide_idx, narrow_idx = prepared["wide_idx"], prepared["narrow_idx"]
    narrow_dims = tuple(part_dims[i] for i in narrow_idx)
    n_wide = 1 if wide_idx else 0

    # Merge the wide parts into one MXU operand (cast + concat fuse in XLA);
    # narrow parts stay separate f32 (consumed by VPU FMAs in the kernel).
    acts = []
    if wide_idx:
        wide = [parts2d[i].astype(cdt) for i in wide_idx]
        acts.append(wide[0] if len(wide) == 1 else jnp.concatenate(wide, axis=-1))
    acts += [parts2d[i] for i in narrow_idx]

    # Row tiling: aim for >= 2 tiles with an even tile count so the "parallel"
    # grid axis splits evenly across v7x's 2 TensorCores (no-op on v5e/v6e).
    if M <= _SUBLANES:
        TM = _round_up(max(M, 1), _SUBLANES)
        num_tiles = 1
    else:
        num_tiles = max(2, -(-M // block_m))
        if num_tiles % 2:
            num_tiles += 1
        TM = _round_up(-(-M // num_tiles), _SUBLANES)
        num_tiles = -(-M // TM)
        if num_tiles % 2:
            num_tiles += 1
    Mp = num_tiles * TM
    if Mp != M:  # only pad activations when actually needed
        acts = [jnp.pad(a, ((0, Mp - M), (0, 0))) for a in acts]

    act_dims = [int(a.shape[-1]) for a in acts]
    weight_args = (([prepared["w1_wide"]] if n_wide else [])
                   + list(prepared["w1_narrow"])
                   + [prepared["b1"], prepared["w2"], prepared["b2"]])

    in_specs = (
        [pl.BlockSpec((TM, d), lambda i: (i, 0)) for d in act_dims] +        # activations
        [pl.BlockSpec((int(w.shape[0]), int(w.shape[1])), lambda i: (0, 0))  # resident weights
         for w in weight_args]
    )
    out_specs = pl.BlockSpec((TM, O), lambda i: (i, 0))  # unpadded O (masked vst, 4x less HBM)

    # VMEM budget: double-buffered, lane-padded blocks (narrow activation tiles
    # occupy a full 128-lane stripe regardless of d) plus weights.
    def _blk_bytes(rows, cols, itemsize):
        return _round_up(rows, _SUBLANES) * _round_up(cols, _LANES) * itemsize

    vmem = 0
    for a, d in zip(acts, act_dims):
        vmem += 2 * _blk_bytes(TM, d, jnp.dtype(a.dtype).itemsize)
    vmem += 2 * _blk_bytes(TM, O, jnp.dtype(out_dtype).itemsize)
    for w in weight_args:
        vmem += 2 * _blk_bytes(int(w.shape[0]), int(w.shape[1]),
                               jnp.dtype(w.dtype).itemsize)
    vmem_limit = min(max(int(vmem * 1.5) + (4 << 20), 16 << 20), 64 << 20)

    out2d = pl.pallas_call(
        _make_decoder_kernel(n_wide, narrow_dims),
        out_shape=jax.ShapeDtypeStruct((Mp, O), out_dtype),
        grid_spec=pltpu.PrefetchScalarGridSpec(
            num_scalar_prefetch=0,
            grid=(num_tiles,),
            in_specs=in_specs,
            out_specs=out_specs,
        ),
        compiler_params=pltpu.CompilerParams(
            dimension_semantics=("parallel",),  # independent row tiles
            vmem_limit_bytes=vmem_limit,
        ),
    )(*acts, *weight_args)

    if Mp != M:
        out2d = out2d[:M, :]
    return out2d.reshape(B, N, O)


# ----------------------------------------------------------------------------
# Reference + test.
# ----------------------------------------------------------------------------
def _reference_forward(x_in, r_det, params, z_lat=None):
    parts = [x_in, r_det] + ([z_lat] if z_lat is not None else [])
    x = jnp.concatenate(parts, axis=-1)
    h = jnp.maximum(x @ params["w1"] + params["b1"], 0.0)
    return h @ params["w2"] + params["b2"]


if __name__ == "__main__":
    key = jax.random.PRNGKey(0)
    kx, kr, kz, kp = jax.random.split(key, 4)

    # Small ANP-like shapes: batch=2, num_target points=8,
    # x_dim=3, deterministic rep dim=32, latent sample dim=32, latent_dim=32.
    B, N = 2, 8
    dx, dr, dz = 3, 32, 32
    latent_dim = 32

    x_in = jax.random.normal(kx, (B, N, dx), jnp.float32)
    r_det = jax.random.normal(kr, (B, N, dr), jnp.float32)
    z_lat = jax.random.normal(kz, (B, N, dz), jnp.float32)

    # --- With latent path (z_lat provided). ---
    params = init_decoder_params(kp, dx + dr + dz, latent_dim)
    ref = _reference_forward(x_in, r_det, params, z_lat=z_lat)

    # f32 compute path: restructured math (merged wide matmul + VPU FMAs)
    # must match the reference exactly.
    prep_f32 = prepare_decoder_params(params, (dx, dr, dz), compute_dtype=jnp.float32)
    out_f32 = jax.block_until_ready(decoder_forward(x_in, r_det, prep_f32, z_lat=z_lat))
    assert out_f32.shape == (B, N, latent_dim)
    assert jnp.allclose(out_f32, ref, atol=1e-5, rtol=1e-5), "f32 mismatch vs reference"

    # bf16 operands / f32 accumulation (production path): loosened tolerance.
    prep_bf16 = prepare_decoder_params(params, (dx, dr, dz), compute_dtype=jnp.bfloat16)
    out_bf16 = jax.block_until_ready(decoder_forward(x_in, r_det, prep_bf16, z_lat=z_lat))
    assert out_bf16.shape == (B, N, latent_dim)
    assert jnp.allclose(out_bf16, ref, atol=3e-2, rtol=3e-2), "bf16 mismatch vs reference"

    # --- Without latent path (deterministic-only decoder). ---
    params2 = init_decoder_params(kp, dx + dr, latent_dim)
    ref2 = _reference_forward(x_in, r_det, params2, z_lat=None)
    prep2 = prepare_decoder_params(params2, (dx, dr), compute_dtype=jnp.bfloat16)
    out2 = jax.block_until_ready(decoder_forward(x_in, r_det, prep2, z_lat=None))
    assert out2.shape == (B, N, latent_dim)
    assert jnp.allclose(out2, ref2, atol=3e-2, rtol=3e-2), "mismatch vs reference (no z_lat)"

    print("KERNEL_OK")
</pallas_src>

<mosaic_0001>
module attributes {stable_mosaic.version = 11 : i64} {
  func.func @kernel(%arg0: i32, %arg1: memref<8x64xf32, #tpu.memory_space<vmem>>, %arg2: memref<8x3xf32, #tpu.memory_space<vmem>>, %arg3: memref<64x128xf32, #tpu.memory_space<vmem>>, %arg4: memref<3x128xf32, #tpu.memory_space<vmem>>, %arg5: memref<1x128xf32, #tpu.memory_space<vmem>>, %arg6: memref<128x32xf32, #tpu.memory_space<vmem>>, %arg7: memref<1x32xf32, #tpu.memory_space<vmem>>, %arg8: memref<8x32xf32, #tpu.memory_space<vmem>>) attributes {dimension_semantics = [#tpu.dimension_semantics<parallel>], iteration_bounds = array<i64: 2>, scalar_prefetch = 0 : i64, scratch_operands = 0 : i64, tpu.core_type = #tpu.core_type<tc>, window_params = [{transform_indices = @transform_0, window_bounds = array<i64: 8, 64>}, {transform_indices = @transform_1, window_bounds = array<i64: 8, 3>}, {pipeline_mode = #tpu.pipeline_mode<synchronous>, transform_indices = @transform_2, window_bounds = array<i64: 64, 128>}, {pipeline_mode = #tpu.pipeline_mode<synchronous>, transform_indices = @transform_3, window_bounds = array<i64: 3, 128>}, {pipeline_mode = #tpu.pipeline_mode<synchronous>, transform_indices = @transform_4, window_bounds = array<i64: 1, 128>}, {pipeline_mode = #tpu.pipeline_mode<synchronous>, transform_indices = @transform_5, window_bounds = array<i64: 128, 32>}, {pipeline_mode = #tpu.pipeline_mode<synchronous>, transform_indices = @transform_6, window_bounds = array<i64: 1, 32>}, {transform_indices = @transform_7, window_bounds = array<i64: 8, 32>}]} {
    %c0 = arith.constant 0 : index
    %c0_0 = arith.constant 0 : index
    %0 = vector.load %arg1[%c0, %c0_0] : memref<8x64xf32, #tpu.memory_space<vmem>>, vector<8x64xf32>
    %c0_1 = arith.constant 0 : index
    %c0_2 = arith.constant 0 : index
    %1 = vector.load %arg3[%c0_1, %c0_2] : memref<64x128xf32, #tpu.memory_space<vmem>>, vector<64x128xf32>
    %cst = arith.constant dense<0.000000e+00> : vector<8x128xf32>
    %2 = tpu.matmul %0, %1, %cst {dimension_numbers = #tpu.dot_dimension_numbers<[1], [0], [0], [1], [0, 0, 1, 1], [], []>} : vector<8x64xf32>, vector<64x128xf32>, vector<8x128xf32> -> vector<8x128xf32>
    %c0_3 = arith.constant 0 : index
    %c0_4 = arith.constant 0 : index
    %3 = vector.load %arg5[%c0_3, %c0_4] : memref<1x128xf32, #tpu.memory_space<vmem>>, vector<1x128xf32>
    %4 = vector.broadcast %3 : vector<1x128xf32> to vector<8x128xf32>
    %5 = arith.addf %2, %4 : vector<8x128xf32>
    %c0_5 = arith.constant 0 : index
    %c0_6 = arith.constant 0 : index
    %6 = vector.load %arg2[%c0_5, %c0_6] : memref<8x3xf32, #tpu.memory_space<vmem>>, vector<8x3xf32>
    %c0_7 = arith.constant 0 : index
    %c0_8 = arith.constant 0 : index
    %7 = vector.load %arg4[%c0_7, %c0_8] : memref<3x128xf32, #tpu.memory_space<vmem>>, vector<3x128xf32>
    %8 = vector.extract_strided_slice %6 {offsets = [0, 0], sizes = [8, 1], strides = [1, 1]} : vector<8x3xf32> to vector<8x1xf32>
    %9 = vector.extract_strided_slice %7 {offsets = [0, 0], sizes = [1, 128], strides = [1, 1]} : vector<3x128xf32> to vector<1x128xf32>
    %10 = vector.broadcast %8 : vector<8x1xf32> to vector<8x128xf32>
    %11 = vector.broadcast %9 : vector<1x128xf32> to vector<8x128xf32>
    %12 = arith.mulf %10, %11 : vector<8x128xf32>
    %13 = arith.addf %5, %12 : vector<8x128xf32>
    %14 = vector.extract_strided_slice %6 {offsets = [0, 1], sizes = [8, 1], strides = [1, 1]} : vector<8x3xf32> to vector<8x1xf32>
    %15 = vector.extract_strided_slice %7 {offsets = [1, 0], sizes = [1, 128], strides = [1, 1]} : vector<3x128xf32> to vector<1x128xf32>
    %16 = vector.broadcast %14 : vector<8x1xf32> to vector<8x128xf32>
    %17 = vector.broadcast %15 : vector<1x128xf32> to vector<8x128xf32>
    %18 = arith.mulf %16, %17 : vector<8x128xf32>
    %19 = arith.addf %13, %18 : vector<8x128xf32>
    %20 = vector.extract_strided_slice %6 {offsets = [0, 2], sizes = [8, 1], strides = [1, 1]} : vector<8x3xf32> to vector<8x1xf32>
    %21 = vector.extract_strided_slice %7 {offsets = [2, 0], sizes = [1, 128], strides = [1, 1]} : vector<3x128xf32> to vector<1x128xf32>
    %22 = vector.broadcast %20 : vector<8x1xf32> to vector<8x128xf32>
    %23 = vector.broadcast %21 : vector<1x128xf32> to vector<8x128xf32>
    %24 = arith.mulf %22, %23 : vector<8x128xf32>
    %25 = arith.addf %19, %24 : vector<8x128xf32>
    %cst_9 = arith.constant 0.000000e+00 : f32
    %26 = vector.broadcast %cst_9 : f32 to vector<8x128xf32>
    %27 = arith.maximumf %25, %26 : vector<8x128xf32>
    %c0_10 = arith.constant 0 : index
    %c0_11 = arith.constant 0 : index
    %28 = vector.load %arg6[%c0_10, %c0_11] : memref<128x32xf32, #tpu.memory_space<vmem>>, vector<128x32xf32>
    %cst_12 = arith.constant dense<0.000000e+00> : vector<8x32xf32>
    %29 = tpu.matmul %27, %28, %cst_12 {dimension_numbers = #tpu.dot_dimension_numbers<[1], [0], [0], [1], [0, 0, 1, 1], [], []>} : vector<8x128xf32>, vector<128x32xf32>, vector<8x32xf32> -> vector<8x32xf32>
    %c0_13 = arith.constant 0 : index
    %c0_14 = arith.constant 0 : index
    %30 = vector.load %arg7[%c0_13, %c0_14] : memref<1x32xf32, #tpu.memory_space<vmem>>, vector<1x32xf32>
    %31 = vector.broadcast %30 : vector<1x32xf32> to vector<8x32xf32>
    %32 = arith.addf %29, %31 : vector<8x32xf32>
    %c0_15 = arith.constant 0 : index
    %c0_16 = arith.constant 0 : index
    %33 = vector.load %arg8[%c0_15, %c0_16] : memref<8x32xf32, #tpu.memory_space<vmem>>, vector<8x32xf32>
    tpu.vector_store %arg8[%c0_15, %c0_16], %32 {strides = array<i32>} : memref<8x32xf32, #tpu.memory_space<vmem>>, vector<8x32xf32>,
    return
  }
  func.func @transform_0(%arg0: i32) -> (i32, i32) {
    %c0_i32 = arith.constant 0 : i32
    %c0_i32_0 = arith.constant 0 : i32
    return %arg0, %c0_i32 : i32, i32
  }
  func.func @transform_1(%arg0: i32) -> (i32, i32) {
    %c0_i32 = arith.constant 0 : i32
    %c0_i32_0 = arith.constant 0 : i32
    return %arg0, %c0_i32 : i32, i32
  }
  func.func @transform_2(%arg0: i32) -> (i32, i32) {
    %c0_i32 = arith.constant 0 : i32
    %c0_i32_0 = arith.constant 0 : i32
    %c0_i32_1 = arith.constant 0 : i32
    return %c0_i32, %c0_i32_0 : i32, i32
  }
  func.func @transform_3(%arg0: i32) -> (i32, i32) {
    %c0_i32 = arith.constant 0 : i32
    %c0_i32_0 = arith.constant 0 : i32
    %c0_i32_1 = arith.constant 0 : i32
    return %c0_i32, %c0_i32_0 : i32, i32
  }
  func.func @transform_4(%arg0: i32) -> (i32, i32) {
    %c0_i32 = arith.constant 0 : i32
    %c0_i32_0 = arith.constant 0 : i32
    %c0_i32_1 = arith.constant 0 : i32
    return %c0_i32, %c0_i32_0 : i32, i32
  }
  func.func @transform_5(%arg0: i32) -> (i32, i32) {
    %c0_i32 = arith.constant 0 : i32
    %c0_i32_0 = arith.constant 0 : i32
    %c0_i32_1 = arith.constant 0 : i32
    return %c0_i32, %c0_i32_0 : i32, i32
  }
  func.func @transform_6(%arg0: i32) -> (i32, i32) {
    %c0_i32 = arith.constant 0 : i32
    %c0_i32_0 = arith.constant 0 : i32
    %c0_i32_1 = arith.constant 0 : i32
    return %c0_i32, %c0_i32_0 : i32, i32
  }
  func.func @transform_7(%arg0: i32) -> (i32, i32) {
    %c0_i32 = arith.constant 0 : i32
    %c0_i32_0 = arith.constant 0 : i32
    return %arg0, %c0_i32 : i32, i32
  }
}

</mosaic_0001>

<llo_original>
// kernel: tpu_custom_call.1
$region0: #{tpu_custom_call.1}
  #allocation0 [shape = 'u32[]', space=smem, size = 0x4, offset = 0x4, fixed_abs, tag = 'smem constant byte address 0x4 - core index']
  #allocation1 [shape = 'u32[72,128]{1,0:T(1,128)}', space=vmem, size = 0x9000, scoped, tag = 'internal scratch']
  %s0 = inlined_call_operand.vmem [shape: f32[16,64], index: 0, kind: input, shape index: {}]
  %s1 = inlined_call_operand.vmem [shape: f32[16,3], index: 1, kind: input, shape index: {}]
  %s2 = inlined_call_operand.vmem [shape: f32[64,128], index: 2, kind: input, shape index: {}]
  %s3 = inlined_call_operand.vmem [shape: f32[3,128], index: 3, kind: input, shape index: {}]
  %s4 = inlined_call_operand.vmem [shape: f32[1,128], index: 4, kind: input, shape index: {}]
  %s5 = inlined_call_operand.vmem [shape: f32[128,32], index: 5, kind: input, shape index: {}]
  %s6 = inlined_call_operand.vmem [shape: f32[1,32], index: 6, kind: input, shape index: {}]
  %s7 = inlined_call_operand.hbm [shape: f32[16,32], index: 7, kind: output, shape index: {}]
  %s8 = sld [smem:[#allocation0]]
  $region61: #{tpu_custom_call.1} parent=0
    _
  %s10 = ssub.s32 1, %s8
  %s11 = scalar_select 0, %s10, %s8
  $region1: #{tpu_custom_call.1} parent=0
    #allocation2 [shape = 'u8[8192]{0}', space=vmem, size = 0x2000, scoped, tag = 'output window, operand 0']
    #allocation3 [shape = 's32[2]{0}', space=sflag, size = 0x8, scoped, tag = 'scoped memory for tpu_custom_call.1']
    %12 = vsyncpa [#allocation3], 0
    %s13 = scalar_lea.sflag [#allocation3], 1
    %14 = vsyncpa %s13, 0
    loop: start=0, step=1, limit=4
    $region2: #{tpu_custom_call.1} parent=1 // loop_pre_header
      _
    $region3: #{tpu_custom_call.1} parent=1 // loop_header
      %s16 = sphi 0, %s20
      %p17 = scmp.ge.s32.totalorder %s16, 4
      %s26 = sphi 0, %s28
      %s29 = sphi 0, %s26
      %s30 = sphi 0, %s29
      %s46 = sphi 0, %s30
      %s52 = sphi 0, %s54
      %s55 = sphi 0, %s52
      %s56 = sphi 0, %s55
      %s72 = sphi 0, %s56
      %s76 = sphi 0, %s76
      %s78 = sphi 0, %s76
      %s79 = sphi 0, %s78
      %s93 = sphi 0, %s79
      %s97 = sphi 0, %s97
      %s99 = sphi 0, %s97
      %s100 = sphi 0, %s99
      %s114 = sphi 0, %s100
      %s118 = sphi 0, %s118
      %s120 = sphi 0, %s118
      %s121 = sphi 0, %s120
      %s135 = sphi 0, %s121
      %s139 = sphi 0, %s139
      %s141 = sphi 0, %s139
      %s142 = sphi 0, %s141
      %s156 = sphi 0, %s142
      %s160 = sphi 0, %s160
      %s162 = sphi 0, %s160
      %s163 = sphi 0, %s162
      %s177 = sphi 0, %s163
      %s183 = sphi 0, %s185
      %s186 = sphi 0, %s183
      %s187 = sphi 0, %s186
      %s203 = sphi 0, %s187
    $region4: #{tpu_custom_call.1} parent=1 // loop_header_branch
      %19 = sbr.rel (%p17) target = $region8
    $region5: #{tpu_custom_call.1} parent=1 // loop_body
      %s21 = ssub.s32 %s16, 1
      %s22 = ssub.s32 %s16, 2
      %s23 = sadd.s32 %s16, 1
      %s24 = ssub.s32 %s16, %s23
      %p25 = scmp.eq.s32.totalorder %s24, 0
      %s27 = sadd.s32 %s26, 1
      %s28 = scalar_select %p25, %s26, %s27
      %p31 = pneg %p25
      %p32 = scmp.eq.s32.totalorder %s16, 1
      %p33 = por %p31, %p32
      %p34 = scmp.ne.s32.totalorder %s26, %s29
      %p35 = scmp.eq.s32.totalorder %s16, 0
      %p36 = por %p34, %p35
      %p37 = scmp.ne.s32.totalorder %s26, %s29
      %p38 = scmp.eq.s32.totalorder %s21, 1
      %p39 = por %p37, %p38
      %p40 = scmp.ne.s32.totalorder %s29, %s30
      %p41 = scmp.eq.s32.totalorder %s21, 0
      %p42 = por %p40, %p41
      %p43 = scmp.ne.s32.totalorder %s29, %s30
      %p44 = scmp.eq.s32.totalorder %s22, 1
      %p45 = por %p43, %p44
      %p47 = scmp.ne.s32.totalorder %s30, %s46
      %p48 = scmp.eq.s32.totalorder %s22, 0
      %p49 = por %p47, %p48
      %s50 = ssub.s32 %s16, %s23
      %p51 = scmp.eq.s32.totalorder %s50, 0
      %s53 = sadd.s32 %s52, 1
      %s54 = scalar_select %p51, %s52, %s53
      %p57 = pneg %p51
      %p58 = scmp.eq.s32.totalorder %s16, 1
      %p59 = por %p57, %p58
      %p60 = scmp.ne.s32.totalorder %s52, %s55
      %p61 = scmp.eq.s32.totalorder %s16, 0
      %p62 = por %p60, %p61
      %p63 = scmp.ne.s32.totalorder %s52, %s55
      %p64 = scmp.eq.s32.totalorder %s21, 1
      %p65 = por %p63, %p64
      %p66 = scmp.ne.s32.totalorder %s55, %s56
      %p67 = scmp.eq.s32.totalorder %s21, 0
      %p68 = por %p66, %p67
      %p69 = scmp.ne.s32.totalorder %s55, %s56
      %p70 = scmp.eq.s32.totalorder %s22, 1
      %p71 = por %p69, %p70
      %p73 = scmp.ne.s32.totalorder %s56, %s72
      %p74 = scmp.eq.s32.totalorder %s22, 0
      %p75 = por %p73, %p74
      %s77 = sadd.s32 %s76, 1
      %p80 = scmp.eq.s32.totalorder %s16, 1
      %p81 = scmp.ne.s32.totalorder %s76, %s78
      %p82 = scmp.eq.s32.totalorder %s16, 0
      %p83 = por %p81, %p82
      %p84 = scmp.ne.s32.totalorder %s76, %s78
      %p85 = scmp.eq.s32.totalorder %s21, 1
      %p86 = por %p84, %p85
      %p87 = scmp.ne.s32.totalorder %s78, %s79
      %p88 = scmp.eq.s32.totalorder %s21, 0
      %p89 = por %p87, %p88
      %p90 = scmp.ne.s32.totalorder %s78, %s79
      %p91 = scmp.eq.s32.totalorder %s22, 1
      %p92 = por %p90, %p91
      %p94 = scmp.ne.s32.totalorder %s79, %s93
      %p95 = scmp.eq.s32.totalorder %s22, 0
      %p96 = por %p94, %p95
      %s98 = sadd.s32 %s97, 1
      %p101 = scmp.eq.s32.totalorder %s16, 1
      %p102 = scmp.ne.s32.totalorder %s97, %s99
      %p103 = scmp.eq.s32.totalorder %s16, 0
      %p104 = por %p102, %p103
      %p105 = scmp.ne.s32.totalorder %s97, %s99
      %p106 = scmp.eq.s32.totalorder %s21, 1
      %p107 = por %p105, %p106
      %p108 = scmp.ne.s32.totalorder %s99, %s100
      %p109 = scmp.eq.s32.totalorder %s21, 0
      %p110 = por %p108, %p109
      %p111 = scmp.ne.s32.totalorder %s99, %s100
      %p112 = scmp.eq.s32.totalorder %s22, 1
      %p113 = por %p111, %p112
      %p115 = scmp.ne.s32.totalorder %s100, %s114
      %p116 = scmp.eq.s32.totalorder %s22, 0
      %p117 = por %p115, %p116
      %s119 = sadd.s32 %s118, 1
      %p122 = scmp.eq.s32.totalorder %s16, 1
      %p123 = scmp.ne.s32.totalorder %s118, %s120
      %p124 = scmp.eq.s32.totalorder %s16, 0
      %p125 = por %p123, %p124
      %p126 = scmp.ne.s32.totalorder %s118, %s120
      %p127 = scmp.eq.s32.totalorder %s21, 1
      %p128 = por %p126, %p127
      %p129 = scmp.ne.s32.totalorder %s120, %s121
      %p130 = scmp.eq.s32.totalorder %s21, 0
      %p131 = por %p129, %p130
      %p132 = scmp.ne.s32.totalorder %s120, %s121
      %p133 = scmp.eq.s32.totalorder %s22, 1
      %p134 = por %p132, %p133
      %p136 = scmp.ne.s32.totalorder %s121, %s135
      %p137 = scmp.eq.s32.totalorder %s22, 0
      %p138 = por %p136, %p137
      %s140 = sadd.s32 %s139, 1
      %p143 = scmp.eq.s32.totalorder %s16, 1
      %p144 = scmp.ne.s32.totalorder %s139, %s141
      %p145 = scmp.eq.s32.totalorder %s16, 0
      %p146 = por %p144, %p145
      %p147 = scmp.ne.s32.totalorder %s139, %s141
      %p148 = scmp.eq.s32.totalorder %s21, 1
      %p149 = por %p147, %p148
      %p150 = scmp.ne.s32.totalorder %s141, %s142
      %p151 = scmp.eq.s32.totalorder %s21, 0
      %p152 = por %p150, %p151
      %p153 = scmp.ne.s32.totalorder %s141, %s142
      %p154 = scmp.eq.s32.totalorder %s22, 1
      %p155 = por %p153, %p154
      %p157 = scmp.ne.s32.totalorder %s142, %s156
      %p158 = scmp.eq.s32.totalorder %s22, 0
      %p159 = por %p157, %p158
      %s161 = sadd.s32 %s160, 1
      %p164 = scmp.eq.s32.totalorder %s16, 1
      %p165 = scmp.ne.s32.totalorder %s160, %s162
      %p166 = scmp.eq.s32.totalorder %s16, 0
      %p167 = por %p165, %p166
      %p168 = scmp.ne.s32.totalorder %s160, %s162
      %p169 = scmp.eq.s32.totalorder %s21, 1
      %p170 = por %p168, %p169
      %p171 = scmp.ne.s32.totalorder %s162, %s163
      %p172 = scmp.eq.s32.totalorder %s21, 0
      %p173 = por %p171, %p172
      %p174 = scmp.ne.s32.totalorder %s162, %s163
      %p175 = scmp.eq.s32.totalorder %s22, 1
      %p176 = por %p174, %p175
      %p178 = scmp.ne.s32.totalorder %s163, %s177
      %p179 = scmp.eq.s32.totalorder %s22, 0
      %p180 = por %p178, %p179
      %s181 = ssub.s32 %s16, %s23
      %p182 = scmp.eq.s32.totalorder %s181, 0
      %s184 = sadd.s32 %s183, 1
      %s185 = scalar_select %p182, %s183, %s184
      %p188 = pneg %p182
      %p189 = scmp.eq.s32.totalorder %s16, 1
      %p190 = por %p188, %p189
      %p191 = scmp.ne.s32.totalorder %s183, %s186
      %p192 = scmp.eq.s32.totalorder %s16, 0
      %p193 = por %p191, %p192
      %p194 = scmp.ne.s32.totalorder %s183, %s186
      %p195 = scmp.eq.s32.totalorder %s21, 1
      %p196 = por %p194, %p195
      %p197 = scmp.ne.s32.totalorder %s186, %s187
      %p198 = scmp.eq.s32.totalorder %s21, 0
      %p199 = por %p197, %p198
      %p200 = scmp.ne.s32.totalorder %s186, %s187
      %p201 = scmp.eq.s32.totalorder %s22, 1
      %p202 = por %p200, %p201
      %p204 = scmp.ne.s32.totalorder %s187, %s203
      %p205 = scmp.eq.s32.totalorder %s22, 0
      %p206 = por %p204, %p205
      %p207 = scmp.le.s32.totalorder 1, %s16
      %p208 = scmp.lt.s32.totalorder %s16, 3
      %p209 = pnand %p207, %p208
      %p210 = pneg %p209
      // Predicated region
      $region9: #{tpu_custom_call.1} parent=5 // pred_check
        _
      $region10: #{tpu_custom_call.1} parent=5 // pred_check_branch
        %212 = sbr.rel (%p209) target = $region12
      $region11: #{tpu_custom_call.1} parent=5 // pred_region
        %s213 = ssub.s32 %s16, 1
        // Predicated region
        $region13: #{tpu_custom_call.1} parent=11 // pred_check
          %p214 = pneg %p89
        $region14: #{tpu_custom_call.1} parent=11 // pred_check_branch
          %216 = sbr.rel (%p214) target = $region16
        $region15: #{tpu_custom_call.1} parent=11 // pred_region
          _
        $region16: #{tpu_custom_call.1} parent=11 // pred_fallthru
          _
        // Predicated region
        $region17: #{tpu_custom_call.1} parent=11 // pred_check
          %p217 = pneg %p110
        $region18: #{tpu_custom_call.1} parent=11 // pred_check_branch
          %219 = sbr.rel (%p217) target = $region20
        $region19: #{tpu_custom_call.1} parent=11 // pred_region
          _
        $region20: #{tpu_custom_call.1} parent=11 // pred_fallthru
          _
        // Predicated region
        $region21: #{tpu_custom_call.1} parent=11 // pred_check
          %p220 = pneg %p131
        $region22: #{tpu_custom_call.1} parent=11 // pred_check_branch
          %222 = sbr.rel (%p220) target = $region24
        $region23: #{tpu_custom_call.1} parent=11 // pred_region
          _
        $region24: #{tpu_custom_call.1} parent=11 // pred_fallthru
          _
        // Predicated region
        $region25: #{tpu_custom_call.1} parent=11 // pred_check
          %p223 = pneg %p152
        $region26: #{tpu_custom_call.1} parent=11 // pred_check_branch
          %225 = sbr.rel (%p223) target = $region28
        $region27: #{tpu_custom_call.1} parent=11 // pred_region
          _
        $region28: #{tpu_custom_call.1} parent=11 // pred_fallthru
          _
        // Predicated region
        $region29: #{tpu_custom_call.1} parent=11 // pred_check
          %p226 = pneg %p173
        $region30: #{tpu_custom_call.1} parent=11 // pred_check_branch
          %228 = sbr.rel (%p226) target = $region32
        $region31: #{tpu_custom_call.1} parent=11 // pred_region
          _
        $region32: #{tpu_custom_call.1} parent=11 // pred_fallthru
          _
      $region12: #{tpu_custom_call.1} parent=5 // pred_fallthru
        _
      %p229 = scmp.lt.s32.totalorder %s16, 2
      // Predicated region
      $region33: #{tpu_custom_call.1} parent=5 // pred_check
        %p230 = pneg %p229
      $region34: #{tpu_custom_call.1} parent=5 // pred_check_branch
        %232 = sbr.rel (%p230) target = $region36
      $region35: #{tpu_custom_call.1} parent=5 // pred_region
        // Predicated region
        $region37: #{tpu_custom_call.1} parent=35 // pred_check
          %p233 = pneg %p36
        $region38: #{tpu_custom_call.1} parent=35 // pred_check_branch
          %235 = sbr.rel (%p233) target = $region40
        $region39: #{tpu_custom_call.1} parent=35 // pred_region
          %p236 = scmp.lt.s32.totalorder %s16, 1
          %s237 = scalar_select %p236, %s16, 1
          %s238 = smul.addr %s237, 8
          %s239 = scalar_lea.vmem %s0, %s238
        $region40: #{tpu_custom_call.1} parent=35 // pred_fallthru
          _
        // Predicated region
        $region41: #{tpu_custom_call.1} parent=35 // pred_check
          %p240 = pneg %p62
        $region42: #{tpu_custom_call.1} parent=35 // pred_check_branch
          %242 = sbr.rel (%p240) target = $region44
        $region43: #{tpu_custom_call.1} parent=35 // pred_region
          %p243 = scmp.lt.s32.totalorder %s16, 1
          %s244 = scalar_select %p243, %s16, 1
          %s245 = smul.addr %s244, 8
          %s246 = scalar_lea.vmem %s1, %s245
        $region44: #{tpu_custom_call.1} parent=35 // pred_fallthru
          _
      $region36: #{tpu_custom_call.1} parent=5 // pred_fallthru
        _
      %p247 = scmp.le.s32.totalorder 1, %s16
      %p248 = scmp.lt.s32.totalorder %s16, 3
      %p249 = pnand %p247, %p248
      %p250 = pneg %p249
      // Predicated region
      $region45: #{tpu_custom_call.1} parent=5 // pred_check
        _
      $region46: #{tpu_custom_call.1} parent=5 // pred_check_branch
        %252 = sbr.rel (%p249) target = $region48
      $region47: #{tpu_custom_call.1} parent=5 // pred_region
        %s253 = ssub.s32 %s16, 1
        %p254 = scmp.lt.s32.totalorder %s21, 1
        %s255 = scalar_select %p254, %s21, 1
        %s256 = smul.addr %s255, 8
        %s257 = scalar_lea.vmem %s0, %s256
        %p258 = pneg %p42
        %p259 = pneg %p39
        %p260 = scmp.lt.s32.totalorder %s21, 1
        %s261 = scalar_select %p260, %s21, 1
        %s262 = smul.addr %s261, 8
        %s263 = scalar_lea.vmem %s1, %s262
        %p264 = pneg %p68
        %p265 = pneg %p65
        %p266 = pneg %p89
        %p267 = pneg %p86
        %p268 = pneg %p110
        %p269 = pneg %p107
        %p270 = pneg %p131
        %p271 = pneg %p128
        %p272 = pneg %p152
        %p273 = pneg %p149
        %p274 = pneg %p173
        %p275 = pneg %p170
        %p276 = pneg %p199
        %p277 = pneg %p196
        %s278 = sand.u32 %s186, 1
        %s279 = scalar_lea.sflag [#allocation3], %s278
        %s280 = sand.u32 %s186, 1
        %s281 = smul.addr %s280, 8
        %s282 = scalar_lea.vmem [#allocation2], %s281
        %p283 = scmp.lt.s32.totalorder %s21, 1
        %s284 = scalar_select %p283, %s21, 1
        %s285 = smul.addr %s284, 8
        %s286 = scalar_lea.vmem %s0, %s285
        %p287 = scmp.lt.s32.totalorder %s21, 1
        %s288 = scalar_select %p287, %s21, 1
        %s289 = smul.addr %s288, 8
        %s290 = scalar_lea.vmem %s1, %s289
        %v291 = vld [vmem:[%s286] sm:$0xff]
        %v292 = vld [vmem:[%s2] sm:$0xff]
        %v293 = vld [vmem:[%s2 + $0x8] sm:$0xff]
        %v294 = vld [vmem:[%s2 + $0x10] sm:$0xff]
        %v295 = vld [vmem:[%s2 + $0x18] sm:$0xff]
        %v296 = vld [vmem:[%s2 + $0x20] sm:$0xff]
        %v297 = vld [vmem:[%s2 + $0x28] sm:$0xff]
        %v298 = vld [vmem:[%s2 + $0x30] sm:$0xff]
        %v299 = vld [vmem:[%s2 + $0x38] sm:$0xff]
        %v300 = vld [vmem:[%s4] sm:$0x1]
        %v302 = vperm.slane %v300, 0
        %vm304 = vcmask 523264
        %v306 = vsel %vm304, %v291, 0
        %308 = vmatpush.msra.mxu0 0.0
        %309 = vmatpush.msra.mxu0 0.0
        %310 = vmatpush.msra.mxu0 0.0
        %311 = vmatpush.msra.mxu0 0.0
        %312 = vmatpush.msra.mxu0 0.0
        %313 = vmatpush.msra.mxu0 0.0
        %314 = vmatpush.msra.mxu0 0.0
        %315 = vmatpush.msra.mxu0 0.0
        %316 = vmatpush.msra.mxu0 %v299
        %317 = vmatpush.msra.mxu0 %v298
        %318 = vmatpush.msra.mxu0 %v297
        %319 = vmatpush.msra.mxu0 %v296
        %320 = vmatpush.msra.mxu0 %v295
        %321 = vmatpush.msra.mxu0 %v294
        %322 = vmatpush.msra.mxu0 %v293
        %323 = vmatpush.msra.mxu0 %v292
        %324 = vmatmul.f32.gmra.mxu0 %v306
        %v325 = vpop.f32.mrf.mxu0
        %v326 = vadd.f32 %v302, %v325
        %327 = vdwg.mxu0
        %v328 = vld [vmem:[%s290] sm:$0xff]
        %v329 = vld [vmem:[%s3] sm:$0x7]
        %331 = vset.pattern.permute.xlu0 0
        %332 = vperm.xlu0 %331, %v328
        %v333 = vpop.permute.xlu0 %332
        %v335 = vperm.slane %v329, 0
        %v336 = vmul.f32 %v333, %v335
        %v337 = vadd.f32 %v326, %v336
        %338 = vset.pattern.permute.xlu0 1
        %339 = vperm.xlu0 %338, %v328
        %v340 = vpop.permute.xlu0 %339
        %v342 = vperm.slane %v329, 1
        %v343 = vmul.f32 %v340, %v342
        %v344 = vadd.f32 %v337, %v343
        %345 = vset.pattern.permute.xlu0 2
        %346 = vperm.xlu0 %345, %v328
        %v347 = vpop.permute.xlu0 %346
        %v349 = vperm.slane %v329, 2
        %v350 = vmul.f32 %v347, %v349
        %v351 = vadd.f32 %v344, %v350
        %v352 = vmax.f32 %v351, 0.0
        %v353 = vld [vmem:[%s5] sm:$0xff]
        %v354 = vld [vmem:[%s5 + $0x8] sm:$0xff]
        %v355 = vld [vmem:[%s5 + $0x10] sm:$0xff]
        %v356 = vld [vmem:[%s5 + $0x18] sm:$0xff]
        %v357 = vld [vmem:[%s5 + $0x20] sm:$0xff]
        %v358 = vld [vmem:[%s5 + $0x28] sm:$0xff]
        %v359 = vld [vmem:[%s5 + $0x30] sm:$0xff]
        %v360 = vld [vmem:[%s5 + $0x38] sm:$0xff]
        %v361 = vld [vmem:[%s5 + $0x40] sm:$0xff]
        %v362 = vld [vmem:[%s5 + $0x48] sm:$0xff]
        %v363 = vld [vmem:[%s5 + $0x50] sm:$0xff]
        %v364 = vld [vmem:[%s5 + $0x58] sm:$0xff]
        %v365 = vld [vmem:[%s5 + $0x60] sm:$0xff]
        %v366 = vld [vmem:[%s5 + $0x68] sm:$0xff]
        %v367 = vld [vmem:[%s5 + $0x70] sm:$0xff]
        %v368 = vld [vmem:[%s5 + $0x78] sm:$0xff]
        %v369 = vld [vmem:[%s6] sm:$0x1]
        %v371 = vperm.slane %v369, 0
        %373 = vmatpush.msra.mxu0 %v368
        %374 = vmatpush.msra.mxu0 %v367
        %375 = vmatpush.msra.mxu0 %v366
        %376 = vmatpush.msra.mxu0 %v365
        %377 = vmatpush.msra.mxu0 %v364
        %378 = vmatpush.msra.mxu0 %v363
        %379 = vmatpush.msra.mxu0 %v362
        %380 = vmatpush.msra.mxu0 %v361
        %381 = vmatpush.msra.mxu0 %v360
        %382 = vmatpush.msra.mxu0 %v359
        %383 = vmatpush.msra.mxu0 %v358
        %384 = vmatpush.msra.mxu0 %v357
        %385 = vmatpush.msra.mxu0 %v356
        %386 = vmatpush.msra.mxu0 %v355
        %387 = vmatpush.msra.mxu0 %v354
        %388 = vmatpush.msra.mxu0 %v353
        %389 = vmatmul.f32.gmra.mxu0 %v352
        %v390 = vpop.f32.mrf.mxu0
        %v391 = vadd.f32 %v371, %v390
        %392 = vdwg.mxu0
        %vm393 = vcmask 261120
        %394 = vst.msk [vmem:[%s282] sm:$0xff] %vm393, %v391
        %s395 = sand.u32 %s186, 1
        %s396 = scalar_lea.sflag [#allocation3], %s395
        %s397 = sand.u32 %s186, 1
        %s398 = smul.addr %s397, 8
        %s399 = scalar_lea.vmem [#allocation2], %s398
        // Predicated region
        $region49: #{tpu_custom_call.1} parent=47 // pred_check
          %p400 = pneg %p196
        $region50: #{tpu_custom_call.1} parent=47 // pred_check_branch
          %402 = sbr.rel (%p400) target = $region52
        $region51: #{tpu_custom_call.1} parent=47 // pred_region
          %404 = vsyncadd %s396, 0
          %s405 = smul.addr %s21, 8
          %s406 = scalar_lea.hbm %s7, %s405
          %s408 = sshll.u32 %s399, 4
          %s409 = int_to_ptr.vmem [resolvable:$true] %s408
          %s410 = sshll.u32 %s406, 4
          %s411 = int_to_ptr.hbm [resolvable:$true] %s410
          %413 = dma.vmem_to_hbm [thread:$0]  %s409, 128, %s411, %s396
        $region52: #{tpu_custom_call.1} parent=47 // pred_fallthru
          _
      $region48: #{tpu_custom_call.1} parent=5 // pred_fallthru
        _
      %p414 = scmp.le.s32.totalorder 2, %s16
      // Predicated region
      $region53: #{tpu_custom_call.1} parent=5 // pred_check
        %p415 = pneg %p414
      $region54: #{tpu_custom_call.1} parent=5 // pred_check_branch
        %417 = sbr.rel (%p415) target = $region56
      $region55: #{tpu_custom_call.1} parent=5 // pred_region
        %s418 = ssub.s32 %s16, 2
        // Predicated region
        $region57: #{tpu_custom_call.1} parent=55 // pred_check
          %p419 = pneg %p202
        $region58: #{tpu_custom_call.1} parent=55 // pred_check_branch
          %421 = sbr.rel (%p419) target = $region60
        $region59: #{tpu_custom_call.1} parent=55 // pred_region
          %s422 = sand.u32 %s187, 1
          %s423 = scalar_lea.sflag [#allocation3], %s422
          %s424 = sand.u32 %s187, 1
          %s425 = smul.addr %s424, 8
          %s426 = scalar_lea.vmem [#allocation2], %s425
          %428 = dma.done %s423, 128
        $region60: #{tpu_custom_call.1} parent=55 // pred_fallthru
          _
      $region56: #{tpu_custom_call.1} parent=5 // pred_fallthru
        _
    $region6: #{tpu_custom_call.1} parent=1 // loop_footer
      %s20 = sadd.s32 1, %s16
    $region7: #{tpu_custom_call.1} parent=1 // loop_footer_branch
      %15 = sbr.rel target = $region3
    $region8: #{tpu_custom_call.1} parent=1 // loop_exit
      _
    %429 = vsyncpa [#allocation3], 1
    %s430 = scalar_lea.sflag [#allocation3], 1
    %431 = vsyncpa %s430, 1

</llo_original>
